<compile_context>
chip_gen: v7x
topology: tpu7x:2x2x1
jax: 0.10.0
libtpu: 0.0.40
codegen_flags: <defaults>
</compile_context>

<pallas_src>
import functools

import jax
import jax.numpy as jnp
import numpy as np
from jax.experimental import pallas as pl
from jax.experimental.pallas import tpu as pltpu


def _cdiv(a, b):
    return -(-a // b)


def _round_up(n, m):
    return ((n + m - 1) // m) * m


def _elu(x):
    # ELU, alpha = 1.0.  exp(x) - 1 (exp is a guaranteed EUP lowering); for the
    # x < 0 branch that is actually selected the difference vs expm1 is ~1e-7.
    return jnp.where(x > 0, x, jnp.exp(x) - 1.0)


def _mlp_kernel(x_ref, w1_ref, b1_ref, w2_ref, b2_ref, w3_ref, b3_ref, o_ref,
                *, chunk):
    """One grid step: [in_f, tile] -> [out_f, tile], batch on the lane axis."""
    # Tiny resident weights -> load once per grid step.
    w1 = w1_ref[...].astype(jnp.float32)      # [h1, in_f]
    b1 = b1_ref[...].astype(jnp.float32)      # [h1, 1]
    w2 = w2_ref[...].astype(jnp.float32)      # [h2, h1]
    b2 = b2_ref[...].astype(jnp.float32)
    w3 = w3_ref[...].astype(jnp.float32)      # [out_f, h2]
    b3 = b3_ref[...].astype(jnp.float32)
    in_f = w1.shape[1]

    def compute(x):                            # x: [in_f, cols] f32
        # Layer 1: K = in_f (=2) -> unrolled broadcast FMAs on the VPU
        # (cheaper than an MXU pass for such a tiny contraction).
        acc = w1[:, 0:1] * x[0:1, :]
        for k in range(1, in_f):
            acc = acc + w1[:, k:k + 1] * x[k:k + 1, :]
        h = _elu(acc + b1)                     # [h1, cols]
        # Layers 2 & 3: 10x10 contractions on the otherwise-idle MXU.
        h = _elu(jnp.dot(w2, h, preferred_element_type=jnp.float32) + b2)
        return jnp.dot(w3, h, preferred_element_type=jnp.float32) + b3

    tile = x_ref.shape[1]
    n_chunks = tile // chunk
    if n_chunks == 1:
        o_ref[...] = compute(x_ref[...].astype(jnp.float32)).astype(o_ref.dtype)
    else:
        def body(c, carry):
            start = pl.multiple_of(c * chunk, chunk)
            x = x_ref[:, pl.ds(start, chunk)].astype(jnp.float32)
            o_ref[:, pl.ds(start, chunk)] = compute(x).astype(o_ref.dtype)
            return carry
        jax.lax.fori_loop(0, n_chunks, body, None)


@functools.partial(jax.jit, static_argnames=("tile_b", "transposed_io"))
def mlp_forward(x, params, *, tile_b=32768, transposed_io=False):
    """Forward pass of the 3-layer MLP.

    x: [B, in_features] (or [in_features, B] if transposed_io=True).
    params: PyTorch layout, w = [out, in], b = [out, 1].
    Returns [B, out_features] (or [out_features, B] if transposed_io=True).
    """
    w1, b1 = params["w1"], params["b1"]
    w2, b2 = params["w2"], params["b2"]
    w3, b3 = params["w3"], params["b3"]

    xT = x if transposed_io else x.T           # [in_f, B]
    in_f, B = xT.shape
    h1, h2, out_f = w1.shape[0], w2.shape[0], w3.shape[0]

    # ----- batch tile selection -----
    if B < 128:
        tile = B                               # single block == full (tiny) batch
    else:
        tile = _round_up(max(128, tile_b), 128)          # lane-dense multiple of 128
        tile = min(tile, _round_up(_cdiv(B, 2), 128))    # >= 2 steps for v7x's 2 TCs
    n_steps = _cdiv(B, tile)                   # ragged last block handled by Pallas

    # Inner chunk size (bounds vreg pressure inside a large grid tile).
    if tile % 512 == 0:
        chunk = 512
    elif tile % 128 == 0:
        chunk = 128
    else:
        chunk = tile

    resident = lambda i: (0, 0)                # weights/biases stay in VMEM

    outT = pl.pallas_call(
        functools.partial(_mlp_kernel, chunk=chunk),
        out_shape=jax.ShapeDtypeStruct((out_f, B), jnp.float32),
        grid=(n_steps,),
        in_specs=[
            pl.BlockSpec((in_f, tile), lambda i: (0, i)),   # x tile (pipelined)
            pl.BlockSpec((h1, in_f), resident),             # w1
            pl.BlockSpec((h1, 1), resident),                # b1
            pl.BlockSpec((h2, h1), resident),               # w2
            pl.BlockSpec((h2, 1), resident),                # b2
            pl.BlockSpec((out_f, h2), resident),            # w3
            pl.BlockSpec((out_f, 1), resident),             # b3
        ],
        out_specs=pl.BlockSpec((out_f, tile), lambda i: (0, i)),
        compiler_params=pltpu.CompilerParams(
            dimension_semantics=("parallel",),   # batch steps split across TCs (v7x)
            vmem_limit_bytes=32 * 1024 * 1024,   # footprint ~192 B/col, ample headroom
        ),
    )(xT, w1, b1, w2, b2, w3, b3)

    return outT if transposed_io else outT.T


def init_params(key, in_features=2, h1=10, h2=10, out_features=10):
    """nn.Linear-style init (uniform +/- 1/sqrt(fan_in)); w = [out, in], b = [out, 1]."""
    ks = jax.random.split(key, 6)

    def lin(kw, kb, fan_in, fan_out):
        bound = 1.0 / np.sqrt(fan_in)
        w = jax.random.uniform(kw, (fan_out, fan_in), jnp.float32, -bound, bound)
        b = jax.random.uniform(kb, (fan_out, 1), jnp.float32, -bound, bound)
        return w, b

    w1, b1 = lin(ks[0], ks[1], in_features, h1)
    w2, b2 = lin(ks[2], ks[3], h1, h2)
    w3, b3 = lin(ks[4], ks[5], h2, out_features)
    return {"w1": w1, "b1": b1, "w2": w2, "b2": b2, "w3": w3, "b3": b3}


def mlp_reference(x, p):
    def elu(v):
        return jnp.where(v > 0, v, jnp.expm1(v))
    h = elu(x @ p["w1"].T + p["b1"].T)
    h = elu(h @ p["w2"].T + p["b2"].T)
    return h @ p["w3"].T + p["b3"].T


if __name__ == "__main__":
    key = jax.random.PRNGKey(0)
    k_p, k_x1, k_x2 = jax.random.split(key, 3)

    in_features, h1, h2, out_features = 2, 10, 10, 10
    params = init_params(k_p, in_features, h1, h2, out_features)

    # Case 1: small batch, ragged last block (B=200 -> 2 grid steps of 128,
    # the second with only 72 valid columns).
    x1 = jax.random.normal(k_x1, (200, in_features), jnp.float32)
    out1 = jax.block_until_ready(mlp_forward(x1, params))
    assert out1.shape == (200, out_features), out1.shape

    # Case 2: exercises the in-kernel chunk loop (tile=1024 -> 2 chunks of 512)
    # plus 2 grid steps.
    x2 = jax.random.normal(k_x2, (2048, in_features), jnp.float32)
    out2 = jax.block_until_ready(mlp_forward(x2, params, tile_b=1024))
    assert out2.shape == (2048, out_features), out2.shape

    # Correctness vs. a pure-JAX reference.  Tolerance leaves headroom for the
    # MXU's generation-dependent f32 pass precision on the two 10x10
    # contractions; layer 1 and the ELUs are exact f32 VPU/EUP math.
    ref1 = mlp_reference(x1, params)
    ref2 = mlp_reference(x2, params)
    np.testing.assert_allclose(np.asarray(out1), np.asarray(ref1), rtol=2e-2, atol=2e-2)
    np.testing.assert_allclose(np.asarray(out2), np.asarray(ref2), rtol=2e-2, atol=2e-2)

    print("KERNEL_OK")
</pallas_src>

<mosaic_0001>
module attributes {stable_mosaic.version = 11 : i64} {
  func.func @_mlp_kernel(%arg0: i32, %arg1: memref<2x128xf32, #tpu.memory_space<vmem>>, %arg2: memref<10x2xf32, #tpu.memory_space<vmem>>, %arg3: memref<10x1xf32, #tpu.memory_space<vmem>>, %arg4: memref<10x10xf32, #tpu.memory_space<vmem>>, %arg5: memref<10x1xf32, #tpu.memory_space<vmem>>, %arg6: memref<10x10xf32, #tpu.memory_space<vmem>>, %arg7: memref<10x1xf32, #tpu.memory_space<vmem>>, %arg8: memref<10x128xf32, #tpu.memory_space<vmem>>) attributes {dimension_semantics = [#tpu.dimension_semantics<parallel>], iteration_bounds = array<i64: 2>, scalar_prefetch = 0 : i64, scratch_operands = 0 : i64, tpu.core_type = #tpu.core_type<tc>, window_params = [{transform_indices = @transform_0, window_bounds = array<i64: 2, 128>}, {pipeline_mode = #tpu.pipeline_mode<synchronous>, transform_indices = @transform_1, window_bounds = array<i64: 10, 2>}, {pipeline_mode = #tpu.pipeline_mode<synchronous>, transform_indices = @transform_2, window_bounds = array<i64: 10, 1>}, {pipeline_mode = #tpu.pipeline_mode<synchronous>, transform_indices = @transform_3, window_bounds = array<i64: 10, 10>}, {pipeline_mode = #tpu.pipeline_mode<synchronous>, transform_indices = @transform_4, window_bounds = array<i64: 10, 1>}, {pipeline_mode = #tpu.pipeline_mode<synchronous>, transform_indices = @transform_5, window_bounds = array<i64: 10, 10>}, {pipeline_mode = #tpu.pipeline_mode<synchronous>, transform_indices = @transform_6, window_bounds = array<i64: 10, 1>}, {transform_indices = @transform_7, window_bounds = array<i64: 10, 128>}]} {
    %c0 = arith.constant 0 : index
    %c0_0 = arith.constant 0 : index
    %0 = vector.load %arg2[%c0, %c0_0] : memref<10x2xf32, #tpu.memory_space<vmem>>, vector<10x2xf32>
    %c0_1 = arith.constant 0 : index
    %c0_2 = arith.constant 0 : index
    %1 = vector.load %arg3[%c0_1, %c0_2] : memref<10x1xf32, #tpu.memory_space<vmem>>, vector<10x1xf32>
    %c0_3 = arith.constant 0 : index
    %c0_4 = arith.constant 0 : index
    %2 = vector.load %arg4[%c0_3, %c0_4] : memref<10x10xf32, #tpu.memory_space<vmem>>, vector<10x10xf32>
    %c0_5 = arith.constant 0 : index
    %c0_6 = arith.constant 0 : index
    %3 = vector.load %arg5[%c0_5, %c0_6] : memref<10x1xf32, #tpu.memory_space<vmem>>, vector<10x1xf32>
    %c0_7 = arith.constant 0 : index
    %c0_8 = arith.constant 0 : index
    %4 = vector.load %arg6[%c0_7, %c0_8] : memref<10x10xf32, #tpu.memory_space<vmem>>, vector<10x10xf32>
    %c0_9 = arith.constant 0 : index
    %c0_10 = arith.constant 0 : index
    %5 = vector.load %arg7[%c0_9, %c0_10] : memref<10x1xf32, #tpu.memory_space<vmem>>, vector<10x1xf32>
    %c0_11 = arith.constant 0 : index
    %c0_12 = arith.constant 0 : index
    %6 = vector.load %arg1[%c0_11, %c0_12] : memref<2x128xf32, #tpu.memory_space<vmem>>, vector<2x128xf32>
    %7 = vector.extract_strided_slice %0 {offsets = [0, 0], sizes = [10, 1], strides = [1, 1]} : vector<10x2xf32> to vector<10x1xf32>
    %8 = vector.extract_strided_slice %6 {offsets = [0, 0], sizes = [1, 128], strides = [1, 1]} : vector<2x128xf32> to vector<1x128xf32>
    %9 = vector.broadcast %7 : vector<10x1xf32> to vector<10x128xf32>
    %10 = vector.broadcast %8 : vector<1x128xf32> to vector<10x128xf32>
    %11 = arith.mulf %9, %10 : vector<10x128xf32>
    %12 = vector.extract_strided_slice %0 {offsets = [0, 1], sizes = [10, 1], strides = [1, 1]} : vector<10x2xf32> to vector<10x1xf32>
    %13 = vector.extract_strided_slice %6 {offsets = [1, 0], sizes = [1, 128], strides = [1, 1]} : vector<2x128xf32> to vector<1x128xf32>
    %14 = vector.broadcast %12 : vector<10x1xf32> to vector<10x128xf32>
    %15 = vector.broadcast %13 : vector<1x128xf32> to vector<10x128xf32>
    %16 = arith.mulf %14, %15 : vector<10x128xf32>
    %17 = arith.addf %11, %16 : vector<10x128xf32>
    %18 = vector.broadcast %1 : vector<10x1xf32> to vector<10x128xf32>
    %19 = arith.addf %17, %18 : vector<10x128xf32>
    %cst = arith.constant 0.000000e+00 : f32
    %20 = vector.broadcast %cst : f32 to vector<10x128xf32>
    %21 = arith.cmpf ogt, %19, %20 : vector<10x128xf32>
    %22 = math.exp %19 : vector<10x128xf32>
    %cst_13 = arith.constant 1.000000e+00 : f32
    %23 = vector.broadcast %cst_13 : f32 to vector<10x128xf32>
    %24 = arith.subf %22, %23 : vector<10x128xf32>
    %25 = arith.select %21, %19, %24 : vector<10x128xi1>, vector<10x128xf32>
    %cst_14 = arith.constant dense<0.000000e+00> : vector<10x128xf32>
    %26 = tpu.matmul %2, %25, %cst_14 {dimension_numbers = #tpu.dot_dimension_numbers<[1], [0], [0], [1], [0, 0, 1, 1], [], []>} : vector<10x10xf32>, vector<10x128xf32>, vector<10x128xf32> -> vector<10x128xf32>
    %27 = vector.broadcast %3 : vector<10x1xf32> to vector<10x128xf32>
    %28 = arith.addf %26, %27 : vector<10x128xf32>
    %cst_15 = arith.constant 0.000000e+00 : f32
    %29 = vector.broadcast %cst_15 : f32 to vector<10x128xf32>
    %30 = arith.cmpf ogt, %28, %29 : vector<10x128xf32>
    %31 = math.exp %28 : vector<10x128xf32>
    %cst_16 = arith.constant 1.000000e+00 : f32
    %32 = vector.broadcast %cst_16 : f32 to vector<10x128xf32>
    %33 = arith.subf %31, %32 : vector<10x128xf32>
    %34 = arith.select %30, %28, %33 : vector<10x128xi1>, vector<10x128xf32>
    %cst_17 = arith.constant dense<0.000000e+00> : vector<10x128xf32>
    %35 = tpu.matmul %4, %34, %cst_17 {dimension_numbers = #tpu.dot_dimension_numbers<[1], [0], [0], [1], [0, 0, 1, 1], [], []>} : vector<10x10xf32>, vector<10x128xf32>, vector<10x128xf32> -> vector<10x128xf32>
    %36 = vector.broadcast %5 : vector<10x1xf32> to vector<10x128xf32>
    %37 = arith.addf %35, %36 : vector<10x128xf32>
    %c0_18 = arith.constant 0 : index
    %c0_19 = arith.constant 0 : index
    %38 = vector.load %arg8[%c0_18, %c0_19] : memref<10x128xf32, #tpu.memory_space<vmem>>, vector<10x128xf32>
    tpu.vector_store %arg8[%c0_18, %c0_19], %37 {strides = array<i32>} : memref<10x128xf32, #tpu.memory_space<vmem>>, vector<10x128xf32>,
    return
  }
  func.func @transform_0(%arg0: i32) -> (i32, i32) {
    %c0_i32 = arith.constant 0 : i32
    %c0_i32_0 = arith.constant 0 : i32
    return %c0_i32, %arg0 : i32, i32
  }
  func.func @transform_1(%arg0: i32) -> (i32, i32) {
    %c0_i32 = arith.constant 0 : i32
    %c0_i32_0 = arith.constant 0 : i32
    %c0_i32_1 = arith.constant 0 : i32
    return %c0_i32, %c0_i32_0 : i32, i32
  }
  func.func @transform_2(%arg0: i32) -> (i32, i32) {
    %c0_i32 = arith.constant 0 : i32
    %c0_i32_0 = arith.constant 0 : i32
    %c0_i32_1 = arith.constant 0 : i32
    return %c0_i32, %c0_i32_0 : i32, i32
  }
  func.func @transform_3(%arg0: i32) -> (i32, i32) {
    %c0_i32 = arith.constant 0 : i32
    %c0_i32_0 = arith.constant 0 : i32
    %c0_i32_1 = arith.constant 0 : i32
    return %c0_i32, %c0_i32_0 : i32, i32
  }
  func.func @transform_4(%arg0: i32) -> (i32, i32) {
    %c0_i32 = arith.constant 0 : i32
    %c0_i32_0 = arith.constant 0 : i32
    %c0_i32_1 = arith.constant 0 : i32
    return %c0_i32, %c0_i32_0 : i32, i32
  }
  func.func @transform_5(%arg0: i32) -> (i32, i32) {
    %c0_i32 = arith.constant 0 : i32
    %c0_i32_0 = arith.constant 0 : i32
    %c0_i32_1 = arith.constant 0 : i32
    return %c0_i32, %c0_i32_0 : i32, i32
  }
  func.func @transform_6(%arg0: i32) -> (i32, i32) {
    %c0_i32 = arith.constant 0 : i32
    %c0_i32_0 = arith.constant 0 : i32
    %c0_i32_1 = arith.constant 0 : i32
    return %c0_i32, %c0_i32_0 : i32, i32
  }
  func.func @transform_7(%arg0: i32) -> (i32, i32) {
    %c0_i32 = arith.constant 0 : i32
    %c0_i32_0 = arith.constant 0 : i32
    return %c0_i32, %arg0 : i32, i32
  }
}

</mosaic_0001>

<llo_original>
// kernel: mlp_forward.1
$region0: #{mlp_forward.1}
  #allocation0 [shape = 'u32[]', space=smem, size = 0x4, offset = 0x4, fixed_abs, tag = 'smem constant byte address 0x4 - core index']
  #allocation1 [shape = 'u32[144,128]{1,0:T(1,128)}', space=vmem, size = 0x12000, scoped, tag = 'internal scratch']
  %s0 = inlined_call_operand.vmem [shape: f32[2,200], index: 0, kind: input, shape index: {}]
  %s1 = inlined_call_operand.vmem [shape: f32[10,2], index: 1, kind: input, shape index: {}]
  %s2 = inlined_call_operand.vmem [shape: f32[10,1], index: 2, kind: input, shape index: {}]
  %s3 = inlined_call_operand.vmem [shape: f32[10,10], index: 3, kind: input, shape index: {}]
  %s4 = inlined_call_operand.vmem [shape: f32[10,1], index: 4, kind: input, shape index: {}]
  %s5 = inlined_call_operand.vmem [shape: f32[10,10], index: 5, kind: input, shape index: {}]
  %s6 = inlined_call_operand.vmem [shape: f32[10,1], index: 6, kind: input, shape index: {}]
  %s7 = inlined_call_operand.hbm [shape: f32[10,200], index: 7, kind: output, shape index: {}]
  %s8 = sld [smem:[#allocation0]]
  $region61: #{mlp_forward.1} parent=0
    _
  %s10 = ssub.s32 1, %s8
  %s11 = scalar_select 0, %s10, %s8
  $region1: #{mlp_forward.1} parent=0
    #allocation2 [shape = 'u8[16384]{0}', space=vmem, size = 0x4000, scoped, tag = 'output window, operand 0']
    #allocation3 [shape = 's32[2]{0}', space=sflag, size = 0x8, scoped, tag = 'scoped memory for mlp_forward.1']
    %12 = vsyncpa [#allocation3], 0
    %s13 = scalar_lea.sflag [#allocation3], 1
    %14 = vsyncpa %s13, 0
    loop: start=0, step=1, limit=4
    $region2: #{mlp_forward.1} parent=1 // loop_pre_header
      _
    $region3: #{mlp_forward.1} parent=1 // loop_header
      %s16 = sphi 0, %s20
      %p17 = scmp.ge.s32.totalorder %s16, 4
      %s26 = sphi 0, %s28
      %s29 = sphi 0, %s26
      %s30 = sphi 0, %s29
      %s46 = sphi 0, %s30
      %s50 = sphi 0, %s50
      %s52 = sphi 0, %s50
      %s53 = sphi 0, %s52
      %s67 = sphi 0, %s53
      %s71 = sphi 0, %s71
      %s73 = sphi 0, %s71
      %s74 = sphi 0, %s73
      %s88 = sphi 0, %s74
      %s92 = sphi 0, %s92
      %s94 = sphi 0, %s92
      %s95 = sphi 0, %s94
      %s109 = sphi 0, %s95
      %s113 = sphi 0, %s113
      %s115 = sphi 0, %s113
      %s116 = sphi 0, %s115
      %s130 = sphi 0, %s116
      %s134 = sphi 0, %s134
      %s136 = sphi 0, %s134
      %s137 = sphi 0, %s136
      %s151 = sphi 0, %s137
      %s155 = sphi 0, %s155
      %s157 = sphi 0, %s155
      %s158 = sphi 0, %s157
      %s172 = sphi 0, %s158
      %s178 = sphi 0, %s180
      %s181 = sphi 0, %s178
      %s182 = sphi 0, %s181
      %s198 = sphi 0, %s182
    $region4: #{mlp_forward.1} parent=1 // loop_header_branch
      %19 = sbr.rel (%p17) target = $region8
    $region5: #{mlp_forward.1} parent=1 // loop_body
      %s21 = ssub.s32 %s16, 1
      %s22 = ssub.s32 %s16, 2
      %s23 = sadd.s32 %s16, 1
      %s24 = ssub.s32 %s16, %s23
      %p25 = scmp.eq.s32.totalorder %s24, 0
      %s27 = sadd.s32 %s26, 1
      %s28 = scalar_select %p25, %s26, %s27
      %p31 = pneg %p25
      %p32 = scmp.eq.s32.totalorder %s16, 1
      %p33 = por %p31, %p32
      %p34 = scmp.ne.s32.totalorder %s26, %s29
      %p35 = scmp.eq.s32.totalorder %s16, 0
      %p36 = por %p34, %p35
      %p37 = scmp.ne.s32.totalorder %s26, %s29
      %p38 = scmp.eq.s32.totalorder %s21, 1
      %p39 = por %p37, %p38
      %p40 = scmp.ne.s32.totalorder %s29, %s30
      %p41 = scmp.eq.s32.totalorder %s21, 0
      %p42 = por %p40, %p41
      %p43 = scmp.ne.s32.totalorder %s29, %s30
      %p44 = scmp.eq.s32.totalorder %s22, 1
      %p45 = por %p43, %p44
      %p47 = scmp.ne.s32.totalorder %s30, %s46
      %p48 = scmp.eq.s32.totalorder %s22, 0
      %p49 = por %p47, %p48
      %s51 = sadd.s32 %s50, 1
      %p54 = scmp.eq.s32.totalorder %s16, 1
      %p55 = scmp.ne.s32.totalorder %s50, %s52
      %p56 = scmp.eq.s32.totalorder %s16, 0
      %p57 = por %p55, %p56
      %p58 = scmp.ne.s32.totalorder %s50, %s52
      %p59 = scmp.eq.s32.totalorder %s21, 1
      %p60 = por %p58, %p59
      %p61 = scmp.ne.s32.totalorder %s52, %s53
      %p62 = scmp.eq.s32.totalorder %s21, 0
      %p63 = por %p61, %p62
      %p64 = scmp.ne.s32.totalorder %s52, %s53
      %p65 = scmp.eq.s32.totalorder %s22, 1
      %p66 = por %p64, %p65
      %p68 = scmp.ne.s32.totalorder %s53, %s67
      %p69 = scmp.eq.s32.totalorder %s22, 0
      %p70 = por %p68, %p69
      %s72 = sadd.s32 %s71, 1
      %p75 = scmp.eq.s32.totalorder %s16, 1
      %p76 = scmp.ne.s32.totalorder %s71, %s73
      %p77 = scmp.eq.s32.totalorder %s16, 0
      %p78 = por %p76, %p77
      %p79 = scmp.ne.s32.totalorder %s71, %s73
      %p80 = scmp.eq.s32.totalorder %s21, 1
      %p81 = por %p79, %p80
      %p82 = scmp.ne.s32.totalorder %s73, %s74
      %p83 = scmp.eq.s32.totalorder %s21, 0
      %p84 = por %p82, %p83
      %p85 = scmp.ne.s32.totalorder %s73, %s74
      %p86 = scmp.eq.s32.totalorder %s22, 1
      %p87 = por %p85, %p86
      %p89 = scmp.ne.s32.totalorder %s74, %s88
      %p90 = scmp.eq.s32.totalorder %s22, 0
      %p91 = por %p89, %p90
      %s93 = sadd.s32 %s92, 1
      %p96 = scmp.eq.s32.totalorder %s16, 1
      %p97 = scmp.ne.s32.totalorder %s92, %s94
      %p98 = scmp.eq.s32.totalorder %s16, 0
      %p99 = por %p97, %p98
      %p100 = scmp.ne.s32.totalorder %s92, %s94
      %p101 = scmp.eq.s32.totalorder %s21, 1
      %p102 = por %p100, %p101
      %p103 = scmp.ne.s32.totalorder %s94, %s95
      %p104 = scmp.eq.s32.totalorder %s21, 0
      %p105 = por %p103, %p104
      %p106 = scmp.ne.s32.totalorder %s94, %s95
      %p107 = scmp.eq.s32.totalorder %s22, 1
      %p108 = por %p106, %p107
      %p110 = scmp.ne.s32.totalorder %s95, %s109
      %p111 = scmp.eq.s32.totalorder %s22, 0
      %p112 = por %p110, %p111
      %s114 = sadd.s32 %s113, 1
      %p117 = scmp.eq.s32.totalorder %s16, 1
      %p118 = scmp.ne.s32.totalorder %s113, %s115
      %p119 = scmp.eq.s32.totalorder %s16, 0
      %p120 = por %p118, %p119
      %p121 = scmp.ne.s32.totalorder %s113, %s115
      %p122 = scmp.eq.s32.totalorder %s21, 1
      %p123 = por %p121, %p122
      %p124 = scmp.ne.s32.totalorder %s115, %s116
      %p125 = scmp.eq.s32.totalorder %s21, 0
      %p126 = por %p124, %p125
      %p127 = scmp.ne.s32.totalorder %s115, %s116
      %p128 = scmp.eq.s32.totalorder %s22, 1
      %p129 = por %p127, %p128
      %p131 = scmp.ne.s32.totalorder %s116, %s130
      %p132 = scmp.eq.s32.totalorder %s22, 0
      %p133 = por %p131, %p132
      %s135 = sadd.s32 %s134, 1
      %p138 = scmp.eq.s32.totalorder %s16, 1
      %p139 = scmp.ne.s32.totalorder %s134, %s136
      %p140 = scmp.eq.s32.totalorder %s16, 0
      %p141 = por %p139, %p140
      %p142 = scmp.ne.s32.totalorder %s134, %s136
      %p143 = scmp.eq.s32.totalorder %s21, 1
      %p144 = por %p142, %p143
      %p145 = scmp.ne.s32.totalorder %s136, %s137
      %p146 = scmp.eq.s32.totalorder %s21, 0
      %p147 = por %p145, %p146
      %p148 = scmp.ne.s32.totalorder %s136, %s137
      %p149 = scmp.eq.s32.totalorder %s22, 1
      %p150 = por %p148, %p149
      %p152 = scmp.ne.s32.totalorder %s137, %s151
      %p153 = scmp.eq.s32.totalorder %s22, 0
      %p154 = por %p152, %p153
      %s156 = sadd.s32 %s155, 1
      %p159 = scmp.eq.s32.totalorder %s16, 1
      %p160 = scmp.ne.s32.totalorder %s155, %s157
      %p161 = scmp.eq.s32.totalorder %s16, 0
      %p162 = por %p160, %p161
      %p163 = scmp.ne.s32.totalorder %s155, %s157
      %p164 = scmp.eq.s32.totalorder %s21, 1
      %p165 = por %p163, %p164
      %p166 = scmp.ne.s32.totalorder %s157, %s158
      %p167 = scmp.eq.s32.totalorder %s21, 0
      %p168 = por %p166, %p167
      %p169 = scmp.ne.s32.totalorder %s157, %s158
      %p170 = scmp.eq.s32.totalorder %s22, 1
      %p171 = por %p169, %p170
      %p173 = scmp.ne.s32.totalorder %s158, %s172
      %p174 = scmp.eq.s32.totalorder %s22, 0
      %p175 = por %p173, %p174
      %s176 = ssub.s32 %s16, %s23
      %p177 = scmp.eq.s32.totalorder %s176, 0
      %s179 = sadd.s32 %s178, 1
      %s180 = scalar_select %p177, %s178, %s179
      %p183 = pneg %p177
      %p184 = scmp.eq.s32.totalorder %s16, 1
      %p185 = por %p183, %p184
      %p186 = scmp.ne.s32.totalorder %s178, %s181
      %p187 = scmp.eq.s32.totalorder %s16, 0
      %p188 = por %p186, %p187
      %p189 = scmp.ne.s32.totalorder %s178, %s181
      %p190 = scmp.eq.s32.totalorder %s21, 1
      %p191 = por %p189, %p190
      %p192 = scmp.ne.s32.totalorder %s181, %s182
      %p193 = scmp.eq.s32.totalorder %s21, 0
      %p194 = por %p192, %p193
      %p195 = scmp.ne.s32.totalorder %s181, %s182
      %p196 = scmp.eq.s32.totalorder %s22, 1
      %p197 = por %p195, %p196
      %p199 = scmp.ne.s32.totalorder %s182, %s198
      %p200 = scmp.eq.s32.totalorder %s22, 0
      %p201 = por %p199, %p200
      %p202 = scmp.le.s32.totalorder 1, %s16
      %p203 = scmp.lt.s32.totalorder %s16, 3
      %p204 = pnand %p202, %p203
      %p205 = pneg %p204
      // Predicated region
      $region9: #{mlp_forward.1} parent=5 // pred_check
        _
      $region10: #{mlp_forward.1} parent=5 // pred_check_branch
        %207 = sbr.rel (%p204) target = $region12
      $region11: #{mlp_forward.1} parent=5 // pred_region
        %s208 = ssub.s32 %s16, 1
        // Predicated region
        $region13: #{mlp_forward.1} parent=11 // pred_check
          %p209 = pneg %p63
        $region14: #{mlp_forward.1} parent=11 // pred_check_branch
          %211 = sbr.rel (%p209) target = $region16
        $region15: #{mlp_forward.1} parent=11 // pred_region
          _
        $region16: #{mlp_forward.1} parent=11 // pred_fallthru
          _
        // Predicated region
        $region17: #{mlp_forward.1} parent=11 // pred_check
          %p212 = pneg %p84
        $region18: #{mlp_forward.1} parent=11 // pred_check_branch
          %214 = sbr.rel (%p212) target = $region20
        $region19: #{mlp_forward.1} parent=11 // pred_region
          _
        $region20: #{mlp_forward.1} parent=11 // pred_fallthru
          _
        // Predicated region
        $region21: #{mlp_forward.1} parent=11 // pred_check
          %p215 = pneg %p105
        $region22: #{mlp_forward.1} parent=11 // pred_check_branch
          %217 = sbr.rel (%p215) target = $region24
        $region23: #{mlp_forward.1} parent=11 // pred_region
          _
        $region24: #{mlp_forward.1} parent=11 // pred_fallthru
          _
        // Predicated region
        $region25: #{mlp_forward.1} parent=11 // pred_check
          %p218 = pneg %p126
        $region26: #{mlp_forward.1} parent=11 // pred_check_branch
          %220 = sbr.rel (%p218) target = $region28
        $region27: #{mlp_forward.1} parent=11 // pred_region
          _
        $region28: #{mlp_forward.1} parent=11 // pred_fallthru
          _
        // Predicated region
        $region29: #{mlp_forward.1} parent=11 // pred_check
          %p221 = pneg %p147
        $region30: #{mlp_forward.1} parent=11 // pred_check_branch
          %223 = sbr.rel (%p221) target = $region32
        $region31: #{mlp_forward.1} parent=11 // pred_region
          _
        $region32: #{mlp_forward.1} parent=11 // pred_fallthru
          _
        // Predicated region
        $region33: #{mlp_forward.1} parent=11 // pred_check
          %p224 = pneg %p168
        $region34: #{mlp_forward.1} parent=11 // pred_check_branch
          %226 = sbr.rel (%p224) target = $region36
        $region35: #{mlp_forward.1} parent=11 // pred_region
          _
        $region36: #{mlp_forward.1} parent=11 // pred_fallthru
          _
      $region12: #{mlp_forward.1} parent=5 // pred_fallthru
        _
      %p227 = scmp.lt.s32.totalorder %s16, 2
      // Predicated region
      $region37: #{mlp_forward.1} parent=5 // pred_check
        %p228 = pneg %p227
      $region38: #{mlp_forward.1} parent=5 // pred_check_branch
        %230 = sbr.rel (%p228) target = $region40
      $region39: #{mlp_forward.1} parent=5 // pred_region
        // Predicated region
        $region41: #{mlp_forward.1} parent=39 // pred_check
          %p231 = pneg %p36
        $region42: #{mlp_forward.1} parent=39 // pred_check_branch
          %233 = sbr.rel (%p231) target = $region44
        $region43: #{mlp_forward.1} parent=39 // pred_region
          %p234 = scmp.lt.s32.totalorder %s16, 1
          %s235 = scalar_select %p234, %s16, 1
          %s236 = smul.addr %s235, 2
          %s237 = scalar_lea.vmem %s0, %s236
        $region44: #{mlp_forward.1} parent=39 // pred_fallthru
          _
      $region40: #{mlp_forward.1} parent=5 // pred_fallthru
        _
      %p238 = scmp.le.s32.totalorder 1, %s16
      %p239 = scmp.lt.s32.totalorder %s16, 3
      %p240 = pnand %p238, %p239
      %p241 = pneg %p240
      // Predicated region
      $region45: #{mlp_forward.1} parent=5 // pred_check
        _
      $region46: #{mlp_forward.1} parent=5 // pred_check_branch
        %243 = sbr.rel (%p240) target = $region48
      $region47: #{mlp_forward.1} parent=5 // pred_region
        %s244 = ssub.s32 %s16, 1
        %p245 = scmp.lt.s32.totalorder %s21, 1
        %s246 = scalar_select %p245, %s21, 1
        %s247 = smul.addr %s246, 2
        %s248 = scalar_lea.vmem %s0, %s247
        %p249 = pneg %p42
        %p250 = pneg %p39
        %p251 = pneg %p63
        %p252 = pneg %p60
        %p253 = pneg %p84
        %p254 = pneg %p81
        %p255 = pneg %p105
        %p256 = pneg %p102
        %p257 = pneg %p126
        %p258 = pneg %p123
        %p259 = pneg %p147
        %p260 = pneg %p144
        %p261 = pneg %p168
        %p262 = pneg %p165
        %p263 = pneg %p194
        %p264 = pneg %p191
        %s265 = sand.u32 %s181, 1
        %s266 = scalar_lea.sflag [#allocation3], %s265
        %s267 = sand.u32 %s181, 1
        %s268 = smul.addr %s267, 16
        %s269 = scalar_lea.vmem [#allocation2], %s268
        %p270 = scmp.lt.s32.totalorder %s21, 1
        %s271 = scalar_select %p270, %s21, 1
        %s272 = smul.addr %s271, 2
        %s273 = scalar_lea.vmem %s0, %s272
        %v274 = vld [vmem:[%s1] sm:$0xff]
        %v275 = vld [vmem:[%s1 + $0x8] sm:$0x3]
        %v276 = vld [vmem:[%s2] sm:$0xff]
        %v277 = vld [vmem:[%s2 + $0x8] sm:$0x3]
        %v278 = vld [vmem:[%s3] sm:$0xff]
        %v279 = vld [vmem:[%s3 + $0x8] sm:$0x3]
        %v280 = vld [vmem:[%s4] sm:$0xff]
        %v281 = vld [vmem:[%s4 + $0x8] sm:$0x3]
        %v282 = vld [vmem:[%s5] sm:$0xff]
        %v283 = vld [vmem:[%s5 + $0x8] sm:$0x3]
        %v284 = vld [vmem:[%s6] sm:$0xff]
        %v285 = vld [vmem:[%s6 + $0x8] sm:$0x3]
        %v286 = vld [vmem:[%s273] sm:$0x3]
        %288 = vset.pattern.permute.xlu0 0
        %289 = vperm.xlu0 %288, %v274
        %v290 = vpop.permute.xlu0 %289
        %293 = vset.pattern.permute.xlu0 0
        %294 = vperm.xlu0 %293, %v275
        %v295 = vpop.permute.xlu0 %294
        %v297 = vlaneseq
        %v298 = vshrl.u32 %v297, 7
        %v299 = vsub.s32 0, %v298
        %v300 = vrot.slane %v286, %v299
        %v301 = vmul.f32 %v290, %v300
        %v302 = vmul.f32 %v295, %v300
        %303 = vset.pattern.permute.xlu0 1
        %304 = vperm.xlu0 %303, %v274
        %v305 = vpop.permute.xlu0 %304
        %307 = vset.pattern.permute.xlu0 1
        %308 = vperm.xlu0 %307, %v275
        %v309 = vpop.permute.xlu0 %308
        %v311 = vlaneseq
        %v312 = vshrl.u32 %v311, 7
        %v313 = vsub.s32 1, %v312
        %v314 = vrot.slane %v286, %v313
        %v315 = vmul.f32 %v305, %v314
        %v316 = vmul.f32 %v309, %v314
        %v317 = vadd.f32 %v301, %v315
        %v318 = vadd.f32 %v302, %v316
        %320 = vset.pattern.permute.xlu0 0
        %321 = vperm.xlu0 %320, %v276
        %v322 = vpop.permute.xlu0 %321
        %325 = vset.pattern.permute.xlu0 0
        %326 = vperm.xlu0 %325, %v277
        %v327 = vpop.permute.xlu0 %326
        %v329 = vadd.f32 %v317, %v322
        %v330 = vadd.f32 %v318, %v327
        %vm331 = vcmp.gt.f32.partialorder %v329, 0.0
        %vm332 = vcmp.gt.f32.partialorder %v330, 0.0
        %v333 = vmul.f32 %v329, 1.442695
        %v334 = vpow.pop %v333
        %v335 = vmul.f32 %v330, 1.442695
        %v336 = vpow.pop %v335
        %v337 = vsub.f32 %v334, 1.0
        %v338 = vsub.f32 %v336, 1.0
        %v339 = vsel %vm331, %v329, %v337
        %v340 = vsel %vm332, %v330, %v338
        %342 = vset.pattern.permute.xlu0 0
        %343 = vperm.xlu0 %342, %v280
        %v344 = vpop.permute.xlu0 %343
        %347 = vset.pattern.permute.xlu0 0
        %348 = vperm.xlu0 %347, %v281
        %v349 = vpop.permute.xlu0 %348
        %vm351 = vcmask 80896
        %v353 = vsel %vm351, %v278, 0
        %v356 = vsel %vm351, %v279, 0
        %vm358 = vcmask 1041408
        %v360 = vsel %vm358, %v340, 0
        %362 = vmatprep.subr.mxu0 0.0
        %363 = vmatpush1.msra.mxu0 %v339
        %364 = vmatprep.subr.mxu0 0.0
        %365 = vmatpush1.msra.mxu0 %v360
        %366 = vmatprep.subr.mxu0 0.0
        %367 = vmatpush1.msra.mxu0 0.0
        %368 = vmatprep.subr.mxu0 0.0
        %369 = vmatpush1.msra.mxu0 0.0
        %370 = vmatprep.subr.mxu0 0.0
        %371 = vmatpush1.msra.mxu0 0.0
        %372 = vmatprep.subr.mxu0 0.0
        %373 = vmatpush1.msra.mxu0 0.0
        %374 = vmatprep.subr.mxu0 0.0
        %375 = vmatpush1.msra.mxu0 0.0
        %376 = vmatprep.subr.mxu0 0.0
        %377 = vmatpush1.msra.mxu0 0.0
        %378 = vmatprep.subr.mxu0 0.0
        %379 = vmatpush1.msra.mxu0 0.0
        %380 = vmatprep.subr.mxu0 0.0
        %381 = vmatpush1.msra.mxu0 0.0
        %382 = vmatprep.subr.mxu0 0.0
        %383 = vmatpush1.msra.mxu0 0.0
        %384 = vmatprep.subr.mxu0 0.0
        %385 = vmatpush1.msra.mxu0 0.0
        %386 = vmatprep.subr.mxu0 0.0
        %387 = vmatpush1.msra.mxu0 0.0
        %388 = vmatprep.subr.mxu0 0.0
        %389 = vmatpush1.msra.mxu0 0.0
        %390 = vmatprep.subr.mxu0 0.0
        %391 = vmatpush1.msra.mxu0 0.0
        %392 = vmatprep.subr.mxu0 0.0
        %393 = vmatpush1.msra.mxu0 0.0
        %394 = vmatprep.subr.mxu0 0.0
        %395 = vmatpush1.msra.mxu0 0.0
        %396 = vmatprep.subr.mxu0 0.0
        %397 = vmatpush1.msra.mxu0 0.0
        %398 = vmatprep.subr.mxu0 0.0
        %399 = vmatpush1.msra.mxu0 0.0
        %400 = vmatprep.subr.mxu0 0.0
        %401 = vmatpush1.msra.mxu0 0.0
        %402 = vmatprep.subr.mxu0 0.0
        %403 = vmatpush1.msra.mxu0 0.0
        %404 = vmatprep.subr.mxu0 0.0
        %405 = vmatpush1.msra.mxu0 0.0
        %406 = vmatprep.subr.mxu0 0.0
        %407 = vmatpush1.msra.mxu0 0.0
        %408 = vmatprep.subr.mxu0 0.0
        %409 = vmatpush1.msra.mxu0 0.0
        %410 = vmatprep.subr.mxu0 0.0
        %411 = vmatpush1.msra.mxu0 0.0
        %412 = vmatprep.subr.mxu0 0.0
        %413 = vmatpush1.msra.mxu0 0.0
        %414 = vmatprep.subr.mxu0 0.0
        %415 = vmatpush1.msra.mxu0 0.0
        %416 = vmatprep.subr.mxu0 0.0
        %417 = vmatpush1.msra.mxu0 0.0
        %418 = vmatprep.subr.mxu0 0.0
        %419 = vmatpush1.msra.mxu0 0.0
        %420 = vmatprep.subr.mxu0 0.0
        %421 = vmatpush1.msra.mxu0 0.0
        %422 = vmatprep.subr.mxu0 0.0
        %423 = vmatpush1.msra.mxu0 0.0
        %424 = vmatprep.subr.mxu0 0.0
        %425 = vmatpush1.msra.mxu0 0.0
        %426 = vmatprep.mubr.f32.mxu0 0.0
        %427 = vmatmul.mubr.f32.gmra.mrb[0].mxu0 %v353
        %v428 = vpop.f32.mrb[0].mxu0
        %v429 = vadd.f32 %v344, %v428
        %v430 = vpop.f32.mrb[0].mxu0
        %431 = vmatprep.mubr.f32.mxu0 0.0
        %432 = vmatmul.mubr.f32.gmra.mrb[0].mxu0 %v356
        %v433 = vpop.f32.mrb[0].mxu0
        %v434 = vadd.f32 %v349, %v433
        %v435 = vpop.f32.mrb[0].mxu0
        %436 = vdwg.mxu0
        %vm437 = vcmp.gt.f32.partialorder %v429, 0.0
        %vm438 = vcmp.gt.f32.partialorder %v434, 0.0
        %v439 = vmul.f32 %v429, 1.442695
        %v440 = vpow.pop %v439
        %v441 = vmul.f32 %v434, 1.442695
        %v442 = vpow.pop %v441
        %v443 = vsub.f32 %v440, 1.0
        %v444 = vsub.f32 %v442, 1.0
        %v445 = vsel %vm437, %v429, %v443
        %v446 = vsel %vm438, %v434, %v444
        %448 = vset.pattern.permute.xlu0 0
        %449 = vperm.xlu0 %448, %v284
        %v450 = vpop.permute.xlu0 %449
        %453 = vset.pattern.permute.xlu0 0
        %454 = vperm.xlu0 %453, %v285
        %v455 = vpop.permute.xlu0 %454
        %v458 = vsel %vm351, %v282, 0
        %v461 = vsel %vm351, %v283, 0
        %v464 = vsel %vm358, %v446, 0
        %466 = vmatprep.subr.mxu0 0.0
        %467 = vmatpush1.msra.mxu0 %v445
        %468 = vmatprep.subr.mxu0 0.0
        %469 = vmatpush1.msra.mxu0 %v464
        %470 = vmatprep.subr.mxu0 0.0
        %471 = vmatpush1.msra.mxu0 0.0
        %472 = vmatprep.subr.mxu0 0.0
        %473 = vmatpush1.msra.mxu0 0.0
        %474 = vmatprep.subr.mxu0 0.0
        %475 = vmatpush1.msra.mxu0 0.0
        %476 = vmatprep.subr.mxu0 0.0
        %477 = vmatpush1.msra.mxu0 0.0
        %478 = vmatprep.subr.mxu0 0.0
        %479 = vmatpush1.msra.mxu0 0.0
        %480 = vmatprep.subr.mxu0 0.0
        %481 = vmatpush1.msra.mxu0 0.0
        %482 = vmatprep.subr.mxu0 0.0
        %483 = vmatpush1.msra.mxu0 0.0
        %484 = vmatprep.subr.mxu0 0.0
        %485 = vmatpush1.msra.mxu0 0.0
        %486 = vmatprep.subr.mxu0 0.0
        %487 = vmatpush1.msra.mxu0 0.0
        %488 = vmatprep.subr.mxu0 0.0
        %489 = vmatpush1.msra.mxu0 0.0
        %490 = vmatprep.subr.mxu0 0.0
        %491 = vmatpush1.msra.mxu0 0.0
        %492 = vmatprep.subr.mxu0 0.0
        %493 = vmatpush1.msra.mxu0 0.0
        %494 = vmatprep.subr.mxu0 0.0
        %495 = vmatpush1.msra.mxu0 0.0
        %496 = vmatprep.subr.mxu0 0.0
        %497 = vmatpush1.msra.mxu0 0.0
        %498 = vmatprep.subr.mxu0 0.0
        %499 = vmatpush1.msra.mxu0 0.0
        %500 = vmatprep.subr.mxu0 0.0
        %501 = vmatpush1.msra.mxu0 0.0
        %502 = vmatprep.subr.mxu0 0.0
        %503 = vmatpush1.msra.mxu0 0.0
        %504 = vmatprep.subr.mxu0 0.0
        %505 = vmatpush1.msra.mxu0 0.0
        %506 = vmatprep.subr.mxu0 0.0
        %507 = vmatpush1.msra.mxu0 0.0
        %508 = vmatprep.subr.mxu0 0.0
        %509 = vmatpush1.msra.mxu0 0.0
        %510 = vmatprep.subr.mxu0 0.0
        %511 = vmatpush1.msra.mxu0 0.0
        %512 = vmatprep.subr.mxu0 0.0
        %513 = vmatpush1.msra.mxu0 0.0
        %514 = vmatprep.subr.mxu0 0.0
        %515 = vmatpush1.msra.mxu0 0.0
        %516 = vmatprep.subr.mxu0 0.0
        %517 = vmatpush1.msra.mxu0 0.0
        %518 = vmatprep.subr.mxu0 0.0
        %519 = vmatpush1.msra.mxu0 0.0
        %520 = vmatprep.subr.mxu0 0.0
        %521 = vmatpush1.msra.mxu0 0.0
        %522 = vmatprep.subr.mxu0 0.0
        %523 = vmatpush1.msra.mxu0 0.0
        %524 = vmatprep.subr.mxu0 0.0
        %525 = vmatpush1.msra.mxu0 0.0
        %526 = vmatprep.subr.mxu0 0.0
        %527 = vmatpush1.msra.mxu0 0.0
        %528 = vmatprep.subr.mxu0 0.0
        %529 = vmatpush1.msra.mxu0 0.0
        %530 = vmatprep.mubr.f32.mxu0 0.0
        %531 = vmatmul.mubr.f32.gmra.mrb[0].mxu0 %v458
        %v532 = vpop.f32.mrb[0].mxu0
        %v533 = vadd.f32 %v450, %v532
        %v534 = vpop.f32.mrb[0].mxu0
        %535 = vmatprep.mubr.f32.mxu0 0.0
        %536 = vmatmul.mubr.f32.gmra.mrb[0].mxu0 %v461
        %v537 = vpop.f32.mrb[0].mxu0
        %v538 = vadd.f32 %v455, %v537
        %v539 = vpop.f32.mrb[0].mxu0
        %540 = vdwg.mxu0
        %541 = vst [vmem:[%s269] sm:$0xff] %v533
        %542 = vst [vmem:[%s269 + $0x8] sm:$0x3] %v538
        %s543 = sand.u32 %s181, 1
        %s544 = scalar_lea.sflag [#allocation3], %s543
        %s545 = sand.u32 %s181, 1
        %s546 = smul.addr %s545, 16
        %s547 = scalar_lea.vmem [#allocation2], %s546
        // Predicated region
        $region49: #{mlp_forward.1} parent=47 // pred_check
          %p548 = pneg %p191
        $region50: #{mlp_forward.1} parent=47 // pred_check_branch
          %550 = sbr.rel (%p548) target = $region52
        $region51: #{mlp_forward.1} parent=47 // pred_region
          %s552 = ssub.s32 256, 256
          %553 = vsyncadd %s544, %s552
          %s554 = smul.addr %s21, 128
          %s555 = scalar_lea.hbm %s7, %s554
          %s556 = sshll.u32 %s547, 4
          %s557 = int_to_ptr.vmem [resolvable:$true] %s556
          %562 = dma.vmem_to_hbm [thread:$0]  %s557, 256, %s555, %s544, 128, 256, 8
        $region52: #{mlp_forward.1} parent=47 // pred_fallthru
          _
      $region48: #{mlp_forward.1} parent=5 // pred_fallthru
        _
      %p563 = scmp.le.s32.totalorder 2, %s16
      // Predicated region
      $region53: #{mlp_forward.1} parent=5 // pred_check
        %p564 = pneg %p563
      $region54: #{mlp_forward.1} parent=5 // pred_check_branch
        %566 = sbr.rel (%p564) target = $region56
      $region55: #{mlp_forward.1} parent=5 // pred_region
        %s567 = ssub.s32 %s16, 2
        // Predicated region
        $region57: #{mlp_forward.1} parent=55 // pred_check
          %p568 = pneg %p197
        $region58: #{mlp_forward.1} parent=55 // pred_check_branch
          %570 = sbr.rel (%p568) target = $region60
        $region59: #{mlp_forward.1} parent=55 // pred_region
          %s571 = sand.u32 %s182, 1
          %s572 = scalar_lea.sflag [#allocation3], %s571
          %s573 = sand.u32 %s182, 1
          %s574 = smul.addr %s573, 16
          %s575 = scalar_lea.vmem [#allocation2], %s574
          %576 = dma.done %s572, 256
        $region60: #{mlp_forward.1} parent=55 // pred_fallthru
          _
      $region56: #{mlp_forward.1} parent=5 // pred_fallthru
        _
    $region6: #{mlp_forward.1} parent=1 // loop_footer
      %s20 = sadd.s32 1, %s16
    $region7: #{mlp_forward.1} parent=1 // loop_footer_branch
      %15 = sbr.rel target = $region3
    $region8: #{mlp_forward.1} parent=1 // loop_exit
      _
    %577 = vsyncpa [#allocation3], 1
    %s578 = scalar_lea.sflag [#allocation3], 1
    %579 = vsyncpa %s578, 1

</llo_original>
